<compile_context>
chip_gen: v7x
topology: tpu7x:2x2x1
jax: 0.10.0
libtpu: 0.0.40
codegen_flags: <defaults>
</compile_context>

<pallas_src>
import functools

import jax
import jax.numpy as jnp
from jax import lax
from jax.experimental import pallas as pl
from jax.experimental.pallas import tpu as pltpu


# ------------------------------ tiling helpers --------------------------------
def _choose_rows_tile(n_rows, target=512):
    """Pick a row tile: multiple of 8, <= target, and (when possible) giving
    at least 2 grid steps so both TensorCores on v7x get work."""
    t = min(target, max(n_rows, 8))
    if n_rows > 8 and t > (n_rows + 1) // 2:
        t = (n_rows + 1) // 2
    t = max(8, ((t + 7) // 8) * 8)  # multiple of 8 (f32 sublane packing)
    return t


def _pad_rows(x2, rows_tile):
    """Zero-pad a (R, D) array so R is a multiple of rows_tile."""
    R = x2.shape[0]
    R_pad = pl.cdiv(R, rows_tile) * rows_tile
    if R_pad != R:
        x2 = jnp.pad(x2, ((0, R_pad - R), (0, 0)))
    return x2, R, R_pad


_VMEM_LIMIT = 32 * 1024 * 1024  # safe on v5e/v6e/v7x


# ------------------------- fused LayerNorm + Linear ----------------------------
def _fused_ln_linear_kernel(x_ref, g_ref, b_ref, w_ref, bias_ref, o_ref, *, eps):
    # LayerNorm in f32 (VPU/EUP work, hidden under the matmul).
    x = x_ref[...].astype(jnp.float32)                       # (tr, Din)
    mean = jnp.mean(x, axis=-1, keepdims=True)
    centered = x - mean
    var = jnp.mean(centered * centered, axis=-1, keepdims=True)
    y = centered * lax.rsqrt(var + eps)                      # rsqrt -> EUP
    y = y * g_ref[...].astype(jnp.float32) + b_ref[...].astype(jnp.float32)
    # Feed the MXU in the weight dtype (bf16 fast path if weights are bf16).
    acc = jnp.dot(y.astype(w_ref.dtype), w_ref[...],
                  preferred_element_type=jnp.float32)        # (tr, Dout)
    acc = acc + bias_ref[...].astype(jnp.float32)
    o_ref[...] = acc.astype(o_ref.dtype)


def prenorm_linear_pallas(x, gamma, beta, w, b, *, eps=1e-5, rows_tile=None):
    """y = LayerNorm(x) @ w + b, fused in one kernel.  x: (..., Din)."""
    orig_shape = x.shape
    Din = orig_shape[-1]
    Dout = w.shape[1]
    x2 = x.reshape(-1, Din)
    if rows_tile is None:
        rows_tile = _choose_rows_tile(x2.shape[0])
    x2, R, R_pad = _pad_rows(x2, rows_tile)
    grid = (R_pad // rows_tile,)

    gamma2 = gamma.reshape(1, Din)
    beta2 = beta.reshape(1, Din)
    b2 = b.reshape(1, Dout)

    cost = pl.CostEstimate(
        flops=2 * R_pad * Din * Dout,
        transcendentals=R_pad,
        bytes_accessed=(R_pad * Din * x.dtype.itemsize
                        + Din * Dout * w.dtype.itemsize
                        + R_pad * Dout * x.dtype.itemsize),
    )

    out = pl.pallas_call(
        functools.partial(_fused_ln_linear_kernel, eps=eps),
        out_shape=jax.ShapeDtypeStruct((R_pad, Dout), x.dtype),
        grid_spec=pltpu.PrefetchScalarGridSpec(
            num_scalar_prefetch=0,
            grid=grid,
            in_specs=[
                pl.BlockSpec((rows_tile, Din), lambda i: (i, 0)),   # x tile
                pl.BlockSpec((1, Din), lambda i: (0, 0)),           # gamma (resident)
                pl.BlockSpec((1, Din), lambda i: (0, 0)),           # beta  (resident)
                pl.BlockSpec((Din, Dout), lambda i: (0, 0)),        # weight (resident)
                pl.BlockSpec((1, Dout), lambda i: (0, 0)),          # bias   (resident)
            ],
            out_specs=pl.BlockSpec((rows_tile, Dout), lambda i: (i, 0)),
        ),
        compiler_params=pltpu.CompilerParams(
            dimension_semantics=("parallel",),
            vmem_limit_bytes=_VMEM_LIMIT),
        cost_estimate=cost,
    )(x2, gamma2, beta2, w, b2)
    return out[:R].reshape(orig_shape[:-1] + (Dout,))
    # TODO(synk): add a (i, j, k) grid with N/K tiling + f32 VMEM accumulator
    #             once Din*Dout no longer fits resident in VMEM (threshold is
    #             half as large on v7x's 64 MiB VMEM).


# ------------------------- standalone LayerNorm kernel -------------------------
# (used by PreNorm when the wrapped fn is an arbitrary callable)
def _layernorm_kernel(x_ref, g_ref, b_ref, o_ref, *, eps):
    x = x_ref[...].astype(jnp.float32)                       # (tr, D)
    mean = jnp.mean(x, axis=-1, keepdims=True)
    centered = x - mean
    var = jnp.mean(centered * centered, axis=-1, keepdims=True)
    y = centered * lax.rsqrt(var + eps)
    y = y * g_ref[...].astype(jnp.float32) + b_ref[...].astype(jnp.float32)
    o_ref[...] = y.astype(o_ref.dtype)


def layernorm_pallas(x, gamma, beta, *, eps=1e-5, rows_tile=None):
    """LayerNorm over last axis. x: (..., D)."""
    orig_shape = x.shape
    D = orig_shape[-1]
    x2 = x.reshape(-1, D)
    if rows_tile is None:
        rows_tile = _choose_rows_tile(x2.shape[0])
    x2, R, R_pad = _pad_rows(x2, rows_tile)

    gamma2 = gamma.reshape(1, D)
    beta2 = beta.reshape(1, D)

    out = pl.pallas_call(
        functools.partial(_layernorm_kernel, eps=eps),
        out_shape=jax.ShapeDtypeStruct((R_pad, D), x.dtype),
        grid_spec=pltpu.PrefetchScalarGridSpec(
            num_scalar_prefetch=0,
            grid=(R_pad // rows_tile,),
            in_specs=[
                pl.BlockSpec((rows_tile, D), lambda i: (i, 0)),
                pl.BlockSpec((1, D), lambda i: (0, 0)),
                pl.BlockSpec((1, D), lambda i: (0, 0)),
            ],
            out_specs=pl.BlockSpec((rows_tile, D), lambda i: (i, 0)),
        ),
        compiler_params=pltpu.CompilerParams(
            dimension_semantics=("parallel",),
            vmem_limit_bytes=_VMEM_LIMIT),
    )(x2, gamma2, beta2)
    return out[:R].reshape(orig_shape)


# ------------------------------ standalone Linear ------------------------------
def _linear_kernel(x_ref, w_ref, b_ref, o_ref):
    acc = jnp.dot(x_ref[...].astype(w_ref.dtype), w_ref[...],
                  preferred_element_type=jnp.float32)
    acc = acc + b_ref[...].astype(jnp.float32)
    o_ref[...] = acc.astype(o_ref.dtype)


def linear_pallas(x, w, b, *, rows_tile=None):
    """y = x @ w + b.  x: (..., Din), w: (Din, Dout), b: (Dout,)."""
    orig_shape = x.shape
    Din = orig_shape[-1]
    Dout = w.shape[1]
    x2 = x.reshape(-1, Din)
    if rows_tile is None:
        rows_tile = _choose_rows_tile(x2.shape[0])
    x2, R, R_pad = _pad_rows(x2, rows_tile)
    b2 = b.reshape(1, Dout)

    out = pl.pallas_call(
        _linear_kernel,
        out_shape=jax.ShapeDtypeStruct((R_pad, Dout), x.dtype),
        grid_spec=pltpu.PrefetchScalarGridSpec(
            num_scalar_prefetch=0,
            grid=(R_pad // rows_tile,),
            in_specs=[
                pl.BlockSpec((rows_tile, Din), lambda i: (i, 0)),
                pl.BlockSpec((Din, Dout), lambda i: (0, 0)),
                pl.BlockSpec((1, Dout), lambda i: (0, 0)),
            ],
            out_specs=pl.BlockSpec((rows_tile, Dout), lambda i: (i, 0)),
        ),
        compiler_params=pltpu.CompilerParams(
            dimension_semantics=("parallel",),
            vmem_limit_bytes=_VMEM_LIMIT),
    )(x2, w, b2)
    return out[:R].reshape(orig_shape[:-1] + (Dout,))


# --------------------------------- modules -------------------------------------
class Linear:
    """Simple Linear(dim_in, dim_out) holder; standalone use goes through
    linear_pallas, but PreNorm fuses it with the LayerNorm."""

    def __init__(self, w, b):
        self.w = w
        self.b = b

    def __call__(self, x):
        return linear_pallas(x, self.w, self.b)


class PreNorm:
    """JAX/Pallas equivalent of:
         self.ln = nn.LayerNorm(dim);  forward(x) = fn(ln(x), **kwargs)
    LayerNorm params initialized like PyTorch defaults (weight=1, bias=0).
    If fn is a Linear, LayerNorm + matmul are fused into one kernel."""

    def __init__(self, dim, fn, eps=1e-5):
        self.dim = dim
        self.fn = fn
        self.eps = eps
        self.gamma = jnp.ones((dim,), jnp.float32)   # nn.LayerNorm default weight
        self.beta = jnp.zeros((dim,), jnp.float32)   # nn.LayerNorm default bias

    def __call__(self, x, **kwargs):
        if isinstance(self.fn, Linear) and not kwargs:
            # Fused LN + Linear: no HBM round-trip for the normalized tensor.
            return prenorm_linear_pallas(x, self.gamma, self.beta,
                                         self.fn.w, self.fn.b, eps=self.eps)
        normed = layernorm_pallas(x, self.gamma, self.beta, eps=self.eps)
        return self.fn(normed, **kwargs)


# ----------------------------------- demo ---------------------------------------
if __name__ == "__main__":
    key = jax.random.PRNGKey(0)
    # Lane-dense last dim (multiple of 128); R = B*S = 128 rows -> 2 grid steps.
    B, S, D = 2, 64, 128

    kx, kw, kb = jax.random.split(key, 3)
    x = jax.random.normal(kx, (B, S, D), dtype=jnp.float32)

    # Deterministic parameters for the wrapped fn (a Linear(dim, dim)).
    w = jax.random.normal(kw, (D, D), dtype=jnp.float32) * (1.0 / jnp.sqrt(D))
    b = jax.random.normal(kb, (D,), dtype=jnp.float32) * 0.01

    block = PreNorm(D, Linear(w, b))

    out = block(x)
    out = jax.block_until_ready(out)

    # Reference check in plain JAX (LayerNorm + Linear).
    mean = jnp.mean(x, axis=-1, keepdims=True)
    var = jnp.mean((x - mean) ** 2, axis=-1, keepdims=True)
    ref = (x - mean) / jnp.sqrt(var + 1e-5)
    ref = jnp.dot(ref, w, precision=lax.Precision.HIGHEST) + b

    assert out.shape == (B, S, D)
    assert jnp.max(jnp.abs(out - ref)) < 1e-3

    print("KERNEL_OK")
</pallas_src>

<mosaic_0001>
module attributes {stable_mosaic.version = 11 : i64} {
  func.func @_fused_ln_linear_kernel(%arg0: i32, %arg1: memref<64x128xf32, #tpu.memory_space<vmem>>, %arg2: memref<1x128xf32, #tpu.memory_space<vmem>>, %arg3: memref<1x128xf32, #tpu.memory_space<vmem>>, %arg4: memref<128x128xf32, #tpu.memory_space<vmem>>, %arg5: memref<1x128xf32, #tpu.memory_space<vmem>>, %arg6: memref<64x128xf32, #tpu.memory_space<vmem>>) attributes {dimension_semantics = [#tpu.dimension_semantics<parallel>], iteration_bounds = array<i64: 2>, scalar_prefetch = 0 : i64, scratch_operands = 0 : i64, tpu.core_type = #tpu.core_type<tc>, window_params = [{transform_indices = @transform_0, window_bounds = array<i64: 64, 128>}, {pipeline_mode = #tpu.pipeline_mode<synchronous>, transform_indices = @transform_1, window_bounds = array<i64: 1, 128>}, {pipeline_mode = #tpu.pipeline_mode<synchronous>, transform_indices = @transform_2, window_bounds = array<i64: 1, 128>}, {pipeline_mode = #tpu.pipeline_mode<synchronous>, transform_indices = @transform_3, window_bounds = array<i64: 128, 128>}, {pipeline_mode = #tpu.pipeline_mode<synchronous>, transform_indices = @transform_4, window_bounds = array<i64: 1, 128>}, {transform_indices = @transform_5, window_bounds = array<i64: 64, 128>}]} {
    %c0 = arith.constant 0 : index
    %c0_0 = arith.constant 0 : index
    %0 = vector.load %arg1[%c0, %c0_0] : memref<64x128xf32, #tpu.memory_space<vmem>>, vector<64x128xf32>
    %cst = arith.constant dense<0.000000e+00> : vector<64xf32>
    %1 = vector.multi_reduction <add>, %0, %cst [1] : vector<64x128xf32> to vector<64xf32>
    %2 = vector.shape_cast %1 : vector<64xf32> to vector<64x1xf32>
    %cst_1 = arith.constant 1.280000e+02 : f32
    %3 = vector.broadcast %cst_1 : f32 to vector<64x1xf32>
    %4 = arith.divf %2, %3 : vector<64x1xf32>
    %5 = vector.broadcast %4 : vector<64x1xf32> to vector<64x128xf32>
    %6 = arith.subf %0, %5 : vector<64x128xf32>
    %7 = arith.mulf %6, %6 : vector<64x128xf32>
    %cst_2 = arith.constant dense<0.000000e+00> : vector<64xf32>
    %8 = vector.multi_reduction <add>, %7, %cst_2 [1] : vector<64x128xf32> to vector<64xf32>
    %9 = vector.shape_cast %8 : vector<64xf32> to vector<64x1xf32>
    %cst_3 = arith.constant 1.280000e+02 : f32
    %10 = vector.broadcast %cst_3 : f32 to vector<64x1xf32>
    %11 = arith.divf %9, %10 : vector<64x1xf32>
    %cst_4 = arith.constant 9.99999974E-6 : f32
    %12 = vector.broadcast %cst_4 : f32 to vector<64x1xf32>
    %13 = arith.addf %11, %12 : vector<64x1xf32>
    %14 = math.rsqrt %13 : vector<64x1xf32>
    %15 = vector.broadcast %14 : vector<64x1xf32> to vector<64x128xf32>
    %16 = arith.mulf %6, %15 : vector<64x128xf32>
    %c0_5 = arith.constant 0 : index
    %c0_6 = arith.constant 0 : index
    %17 = vector.load %arg2[%c0_5, %c0_6] : memref<1x128xf32, #tpu.memory_space<vmem>>, vector<1x128xf32>
    %18 = vector.broadcast %17 : vector<1x128xf32> to vector<64x128xf32>
    %19 = arith.mulf %16, %18 : vector<64x128xf32>
    %c0_7 = arith.constant 0 : index
    %c0_8 = arith.constant 0 : index
    %20 = vector.load %arg3[%c0_7, %c0_8] : memref<1x128xf32, #tpu.memory_space<vmem>>, vector<1x128xf32>
    %21 = vector.broadcast %20 : vector<1x128xf32> to vector<64x128xf32>
    %22 = arith.addf %19, %21 : vector<64x128xf32>
    %c0_9 = arith.constant 0 : index
    %c0_10 = arith.constant 0 : index
    %23 = vector.load %arg4[%c0_9, %c0_10] : memref<128x128xf32, #tpu.memory_space<vmem>>, vector<128x128xf32>
    %cst_11 = arith.constant dense<0.000000e+00> : vector<64x128xf32>
    %24 = tpu.matmul %22, %23, %cst_11 {dimension_numbers = #tpu.dot_dimension_numbers<[1], [0], [0], [1], [0, 0, 1, 1], [], []>} : vector<64x128xf32>, vector<128x128xf32>, vector<64x128xf32> -> vector<64x128xf32>
    %c0_12 = arith.constant 0 : index
    %c0_13 = arith.constant 0 : index
    %25 = vector.load %arg5[%c0_12, %c0_13] : memref<1x128xf32, #tpu.memory_space<vmem>>, vector<1x128xf32>
    %26 = vector.broadcast %25 : vector<1x128xf32> to vector<64x128xf32>
    %27 = arith.addf %24, %26 : vector<64x128xf32>
    %c0_14 = arith.constant 0 : index
    %c0_15 = arith.constant 0 : index
    %28 = vector.load %arg6[%c0_14, %c0_15] : memref<64x128xf32, #tpu.memory_space<vmem>>, vector<64x128xf32>
    tpu.vector_store %arg6[%c0_14, %c0_15], %27 {strides = array<i32>} : memref<64x128xf32, #tpu.memory_space<vmem>>, vector<64x128xf32>,
    return
  }
  func.func @transform_0(%arg0: i32) -> (i32, i32) {
    %c0_i32 = arith.constant 0 : i32
    %c0_i32_0 = arith.constant 0 : i32
    return %arg0, %c0_i32 : i32, i32
  }
  func.func @transform_1(%arg0: i32) -> (i32, i32) {
    %c0_i32 = arith.constant 0 : i32
    %c0_i32_0 = arith.constant 0 : i32
    %c0_i32_1 = arith.constant 0 : i32
    return %c0_i32, %c0_i32_0 : i32, i32
  }
  func.func @transform_2(%arg0: i32) -> (i32, i32) {
    %c0_i32 = arith.constant 0 : i32
    %c0_i32_0 = arith.constant 0 : i32
    %c0_i32_1 = arith.constant 0 : i32
    return %c0_i32, %c0_i32_0 : i32, i32
  }
  func.func @transform_3(%arg0: i32) -> (i32, i32) {
    %c0_i32 = arith.constant 0 : i32
    %c0_i32_0 = arith.constant 0 : i32
    %c0_i32_1 = arith.constant 0 : i32
    return %c0_i32, %c0_i32_0 : i32, i32
  }
  func.func @transform_4(%arg0: i32) -> (i32, i32) {
    %c0_i32 = arith.constant 0 : i32
    %c0_i32_0 = arith.constant 0 : i32
    %c0_i32_1 = arith.constant 0 : i32
    return %c0_i32, %c0_i32_0 : i32, i32
  }
  func.func @transform_5(%arg0: i32) -> (i32, i32) {
    %c0_i32 = arith.constant 0 : i32
    %c0_i32_0 = arith.constant 0 : i32
    return %arg0, %c0_i32 : i32, i32
  }
}

</mosaic_0001>

<llo_original>
// kernel: tpu_custom_call.1
$region0: #{tpu_custom_call.1}
  #allocation0 [shape = 'u32[]', space=smem, size = 0x4, offset = 0x4, fixed_abs, tag = 'smem constant byte address 0x4 - core index']
  #allocation1 [shape = 'u32[144,128]{1,0:T(1,128)}', space=vmem, size = 0x12000, scoped, tag = 'internal scratch']
  %s0 = inlined_call_operand.hbm [shape: f32[128,128], index: 0, kind: input, shape index: {}]
  %s1 = inlined_call_operand.vmem [shape: f32[1,128], index: 1, kind: input, shape index: {}]
  %s2 = inlined_call_operand.vmem [shape: f32[1,128], index: 2, kind: input, shape index: {}]
  %s3 = inlined_call_operand.hbm [shape: f32[128,128], index: 3, kind: input, shape index: {}]
  %s4 = inlined_call_operand.vmem [shape: f32[1,128], index: 4, kind: input, shape index: {}]
  %s5 = inlined_call_operand.hbm [shape: f32[128,128], index: 5, kind: output, shape index: {}]
  %s6 = sld [smem:[#allocation0]]
  $region61: #{tpu_custom_call.1} parent=0
    _
  %s8 = ssub.s32 1, %s6
  %s9 = scalar_select 0, %s8, %s6
  $region1: #{tpu_custom_call.1} parent=0
    #allocation2 [shape = 'u8[65536]{0}', space=vmem, size = 0x10000, scoped, tag = 'input window, operand 0']
    #allocation3 [shape = 's32[2]{0}', space=sflag, size = 0x8, scoped, tag = 'scoped memory for tpu_custom_call.1']
    #allocation4 [shape = 's32[2]{0}', space=sflag, size = 0x8, scoped, tag = 'scoped memory for tpu_custom_call.1']
    #allocation5 [shape = 'u8[65536]{0}', space=vmem, size = 0x10000, scoped, tag = 'input window, operand 3, single buffered']
    #allocation6 [shape = 's32[1]{0}', space=sflag, size = 0x4, scoped, tag = 'scoped memory for tpu_custom_call.1']
    #allocation7 [shape = 'u8[65536]{0}', space=vmem, size = 0x10000, scoped, tag = 'output window, operand 0']
    %10 = vsyncpa [#allocation3], 0
    %s11 = scalar_lea.sflag [#allocation3], 1
    %12 = vsyncpa %s11, 0
    %13 = vsyncpa [#allocation6], 0
    %14 = vsyncpa [#allocation4], 0
    %s15 = scalar_lea.sflag [#allocation4], 1
    %16 = vsyncpa %s15, 0
    loop: start=0, step=1, limit=4
    $region2: #{tpu_custom_call.1} parent=1 // loop_pre_header
      _
    $region3: #{tpu_custom_call.1} parent=1 // loop_header
      %s18 = sphi 0, %s22
      %p19 = scmp.ge.s32.totalorder %s18, 4
      %s28 = sphi 0, %s30
      %s31 = sphi 0, %s28
      %s32 = sphi 0, %s31
      %s48 = sphi 0, %s32
      %s52 = sphi 0, %s52
      %s54 = sphi 0, %s52
      %s55 = sphi 0, %s54
      %s69 = sphi 0, %s55
      %s73 = sphi 0, %s73
      %s75 = sphi 0, %s73
      %s76 = sphi 0, %s75
      %s90 = sphi 0, %s76
      %s94 = sphi 0, %s94
      %s96 = sphi 0, %s94
      %s97 = sphi 0, %s96
      %s111 = sphi 0, %s97
      %s115 = sphi 0, %s115
      %s117 = sphi 0, %s115
      %s118 = sphi 0, %s117
      %s132 = sphi 0, %s118
      %s138 = sphi 0, %s140
      %s141 = sphi 0, %s138
      %s142 = sphi 0, %s141
      %s158 = sphi 0, %s142
    $region4: #{tpu_custom_call.1} parent=1 // loop_header_branch
      %21 = sbr.rel (%p19) target = $region8
    $region5: #{tpu_custom_call.1} parent=1 // loop_body
      %s23 = ssub.s32 %s18, 1
      %s24 = ssub.s32 %s18, 2
      %s25 = sadd.s32 %s18, 1
      %s26 = ssub.s32 %s18, %s25
      %p27 = scmp.eq.s32.totalorder %s26, 0
      %s29 = sadd.s32 %s28, 1
      %s30 = scalar_select %p27, %s28, %s29
      %p33 = pneg %p27
      %p34 = scmp.eq.s32.totalorder %s18, 1
      %p35 = por %p33, %p34
      %p36 = scmp.ne.s32.totalorder %s28, %s31
      %p37 = scmp.eq.s32.totalorder %s18, 0
      %p38 = por %p36, %p37
      %p39 = scmp.ne.s32.totalorder %s28, %s31
      %p40 = scmp.eq.s32.totalorder %s23, 1
      %p41 = por %p39, %p40
      %p42 = scmp.ne.s32.totalorder %s31, %s32
      %p43 = scmp.eq.s32.totalorder %s23, 0
      %p44 = por %p42, %p43
      %p45 = scmp.ne.s32.totalorder %s31, %s32
      %p46 = scmp.eq.s32.totalorder %s24, 1
      %p47 = por %p45, %p46
      %p49 = scmp.ne.s32.totalorder %s32, %s48
      %p50 = scmp.eq.s32.totalorder %s24, 0
      %p51 = por %p49, %p50
      %s53 = sadd.s32 %s52, 1
      %p56 = scmp.eq.s32.totalorder %s18, 1
      %p57 = scmp.ne.s32.totalorder %s52, %s54
      %p58 = scmp.eq.s32.totalorder %s18, 0
      %p59 = por %p57, %p58
      %p60 = scmp.ne.s32.totalorder %s52, %s54
      %p61 = scmp.eq.s32.totalorder %s23, 1
      %p62 = por %p60, %p61
      %p63 = scmp.ne.s32.totalorder %s54, %s55
      %p64 = scmp.eq.s32.totalorder %s23, 0
      %p65 = por %p63, %p64
      %p66 = scmp.ne.s32.totalorder %s54, %s55
      %p67 = scmp.eq.s32.totalorder %s24, 1
      %p68 = por %p66, %p67
      %p70 = scmp.ne.s32.totalorder %s55, %s69
      %p71 = scmp.eq.s32.totalorder %s24, 0
      %p72 = por %p70, %p71
      %s74 = sadd.s32 %s73, 1
      %p77 = scmp.eq.s32.totalorder %s18, 1
      %p78 = scmp.ne.s32.totalorder %s73, %s75
      %p79 = scmp.eq.s32.totalorder %s18, 0
      %p80 = por %p78, %p79
      %p81 = scmp.ne.s32.totalorder %s73, %s75
      %p82 = scmp.eq.s32.totalorder %s23, 1
      %p83 = por %p81, %p82
      %p84 = scmp.ne.s32.totalorder %s75, %s76
      %p85 = scmp.eq.s32.totalorder %s23, 0
      %p86 = por %p84, %p85
      %p87 = scmp.ne.s32.totalorder %s75, %s76
      %p88 = scmp.eq.s32.totalorder %s24, 1
      %p89 = por %p87, %p88
      %p91 = scmp.ne.s32.totalorder %s76, %s90
      %p92 = scmp.eq.s32.totalorder %s24, 0
      %p93 = por %p91, %p92
      %s95 = sadd.s32 %s94, 1
      %p98 = scmp.eq.s32.totalorder %s18, 1
      %p99 = scmp.ne.s32.totalorder %s94, %s96
      %p100 = scmp.eq.s32.totalorder %s18, 0
      %p101 = por %p99, %p100
      %p102 = scmp.ne.s32.totalorder %s94, %s96
      %p103 = scmp.eq.s32.totalorder %s23, 1
      %p104 = por %p102, %p103
      %p105 = scmp.ne.s32.totalorder %s96, %s97
      %p106 = scmp.eq.s32.totalorder %s23, 0
      %p107 = por %p105, %p106
      %p108 = scmp.ne.s32.totalorder %s96, %s97
      %p109 = scmp.eq.s32.totalorder %s24, 1
      %p110 = por %p108, %p109
      %p112 = scmp.ne.s32.totalorder %s97, %s111
      %p113 = scmp.eq.s32.totalorder %s24, 0
      %p114 = por %p112, %p113
      %s116 = sadd.s32 %s115, 1
      %p119 = scmp.eq.s32.totalorder %s18, 1
      %p120 = scmp.ne.s32.totalorder %s115, %s117
      %p121 = scmp.eq.s32.totalorder %s18, 0
      %p122 = por %p120, %p121
      %p123 = scmp.ne.s32.totalorder %s115, %s117
      %p124 = scmp.eq.s32.totalorder %s23, 1
      %p125 = por %p123, %p124
      %p126 = scmp.ne.s32.totalorder %s117, %s118
      %p127 = scmp.eq.s32.totalorder %s23, 0
      %p128 = por %p126, %p127
      %p129 = scmp.ne.s32.totalorder %s117, %s118
      %p130 = scmp.eq.s32.totalorder %s24, 1
      %p131 = por %p129, %p130
      %p133 = scmp.ne.s32.totalorder %s118, %s132
      %p134 = scmp.eq.s32.totalorder %s24, 0
      %p135 = por %p133, %p134
      %s136 = ssub.s32 %s18, %s25
      %p137 = scmp.eq.s32.totalorder %s136, 0
      %s139 = sadd.s32 %s138, 1
      %s140 = scalar_select %p137, %s138, %s139
      %p143 = pneg %p137
      %p144 = scmp.eq.s32.totalorder %s18, 1
      %p145 = por %p143, %p144
      %p146 = scmp.ne.s32.totalorder %s138, %s141
      %p147 = scmp.eq.s32.totalorder %s18, 0
      %p148 = por %p146, %p147
      %p149 = scmp.ne.s32.totalorder %s138, %s141
      %p150 = scmp.eq.s32.totalorder %s23, 1
      %p151 = por %p149, %p150
      %p152 = scmp.ne.s32.totalorder %s141, %s142
      %p153 = scmp.eq.s32.totalorder %s23, 0
      %p154 = por %p152, %p153
      %p155 = scmp.ne.s32.totalorder %s141, %s142
      %p156 = scmp.eq.s32.totalorder %s24, 1
      %p157 = por %p155, %p156
      %p159 = scmp.ne.s32.totalorder %s142, %s158
      %p160 = scmp.eq.s32.totalorder %s24, 0
      %p161 = por %p159, %p160
      %p162 = scmp.le.s32.totalorder 1, %s18
      %p163 = scmp.lt.s32.totalorder %s18, 3
      %p164 = pnand %p162, %p163
      %p165 = pneg %p164
      // Predicated region
      $region9: #{tpu_custom_call.1} parent=5 // pred_check
        _
      $region10: #{tpu_custom_call.1} parent=5 // pred_check_branch
        %167 = sbr.rel (%p164) target = $region12
      $region11: #{tpu_custom_call.1} parent=5 // pred_region
        %s168 = ssub.s32 %s18, 1
        // Predicated region
        $region13: #{tpu_custom_call.1} parent=11 // pred_check
          %p169 = pneg %p65
        $region14: #{tpu_custom_call.1} parent=11 // pred_check_branch
          %171 = sbr.rel (%p169) target = $region16
        $region15: #{tpu_custom_call.1} parent=11 // pred_region
          _
        $region16: #{tpu_custom_call.1} parent=11 // pred_fallthru
          _
        // Predicated region
        $region17: #{tpu_custom_call.1} parent=11 // pred_check
          %p172 = pneg %p86
        $region18: #{tpu_custom_call.1} parent=11 // pred_check_branch
          %174 = sbr.rel (%p172) target = $region20
        $region19: #{tpu_custom_call.1} parent=11 // pred_region
          _
        $region20: #{tpu_custom_call.1} parent=11 // pred_fallthru
          _
        // Predicated region
        $region21: #{tpu_custom_call.1} parent=11 // pred_check
          %p175 = pneg %p107
        $region22: #{tpu_custom_call.1} parent=11 // pred_check_branch
          %177 = sbr.rel (%p175) target = $region24
        $region23: #{tpu_custom_call.1} parent=11 // pred_region
          %s179 = ssub.s32 2048, 2048
          %180 = vsyncadd [#allocation6], %s179
          %s181 = sshll.u32 [#allocation5], 4
          %s182 = int_to_ptr.vmem [resolvable:$true] %s181
          %187 = dma.hbm_to_vmem [thread:$0]  %s3, 2048, %s182, [#allocation6], 128, 128, 8
        $region24: #{tpu_custom_call.1} parent=11 // pred_fallthru
          _
        // Predicated region
        $region25: #{tpu_custom_call.1} parent=11 // pred_check
          %p188 = pneg %p128
        $region26: #{tpu_custom_call.1} parent=11 // pred_check_branch
          %190 = sbr.rel (%p188) target = $region28
        $region27: #{tpu_custom_call.1} parent=11 // pred_region
          _
        $region28: #{tpu_custom_call.1} parent=11 // pred_fallthru
          _
      $region12: #{tpu_custom_call.1} parent=5 // pred_fallthru
        _
      %p191 = scmp.lt.s32.totalorder %s18, 2
      // Predicated region
      $region29: #{tpu_custom_call.1} parent=5 // pred_check
        %p192 = pneg %p191
      $region30: #{tpu_custom_call.1} parent=5 // pred_check_branch
        %194 = sbr.rel (%p192) target = $region32
      $region31: #{tpu_custom_call.1} parent=5 // pred_region
        // Predicated region
        $region33: #{tpu_custom_call.1} parent=31 // pred_check
          %p195 = pneg %p38
        $region34: #{tpu_custom_call.1} parent=31 // pred_check_branch
          %197 = sbr.rel (%p195) target = $region36
        $region35: #{tpu_custom_call.1} parent=31 // pred_region
          %s198 = sand.u32 %s28, 1
          %s199 = scalar_lea.sflag [#allocation3], %s198
          %s200 = sand.u32 %s28, 1
          %s201 = smul.addr %s200, 64
          %s202 = scalar_lea.vmem [#allocation2], %s201
          %s203 = smul.u32 8, %s18
          %s205 = ssub.s32 1024, 1024
          %206 = vsyncadd %s199, %s205
          %s207 = smul.addr %s203, 128
          %s208 = scalar_lea.hbm %s0, %s207
          %s209 = sshll.u32 %s202, 4
          %s210 = int_to_ptr.vmem [resolvable:$true] %s209
          %215 = dma.hbm_to_vmem [thread:$0]  %s208, 1024, %s210, %s199, 128, 128, 8
        $region36: #{tpu_custom_call.1} parent=31 // pred_fallthru
          _
      $region32: #{tpu_custom_call.1} parent=5 // pred_fallthru
        _
      %p216 = scmp.le.s32.totalorder 1, %s18
      %p217 = scmp.lt.s32.totalorder %s18, 3
      %p218 = pnand %p216, %p217
      %p219 = pneg %p218
      // Predicated region
      $region37: #{tpu_custom_call.1} parent=5 // pred_check
        _
      $region38: #{tpu_custom_call.1} parent=5 // pred_check_branch
        %221 = sbr.rel (%p218) target = $region40
      $region39: #{tpu_custom_call.1} parent=5 // pred_region
        %s222 = ssub.s32 %s18, 1
        %s223 = sand.u32 %s31, 1
        %s224 = scalar_lea.sflag [#allocation3], %s223
        %s225 = sand.u32 %s31, 1
        %s226 = smul.addr %s225, 64
        %s227 = scalar_lea.vmem [#allocation2], %s226
        // Predicated region
        $region41: #{tpu_custom_call.1} parent=39 // pred_check
          %p228 = pneg %p44
        $region42: #{tpu_custom_call.1} parent=39 // pred_check_branch
          %230 = sbr.rel (%p228) target = $region44
        $region43: #{tpu_custom_call.1} parent=39 // pred_region
          %231 = dma.done %s224, 1024
        $region44: #{tpu_custom_call.1} parent=39 // pred_fallthru
          _
        // Predicated region
        $region45: #{tpu_custom_call.1} parent=39 // pred_check
          %p232 = pneg %p107
        $region46: #{tpu_custom_call.1} parent=39 // pred_check_branch
          %234 = sbr.rel (%p232) target = $region48
        $region47: #{tpu_custom_call.1} parent=39 // pred_region
          %235 = dma.done [#allocation6], 2048
        $region48: #{tpu_custom_call.1} parent=39 // pred_fallthru
          _
        %s236 = sand.u32 %s31, 1
        %s237 = scalar_lea.sflag [#allocation3], %s236
        %s238 = sand.u32 %s31, 1
        %s239 = smul.addr %s238, 64
        %s240 = scalar_lea.vmem [#allocation2], %s239
        %p241 = pneg %p44
        %p242 = pneg %p41
        %p243 = pneg %p65
        %p244 = pneg %p62
        %p245 = pneg %p86
        %p246 = pneg %p83
        %p247 = pneg %p107
        %p248 = pneg %p104
        %p249 = pneg %p128
        %p250 = pneg %p125
        %p251 = pneg %p154
        %p252 = pneg %p151
        %s253 = sand.u32 %s141, 1
        %s254 = scalar_lea.sflag [#allocation4], %s253
        %s255 = sand.u32 %s141, 1
        %s256 = smul.addr %s255, 64
        %s257 = scalar_lea.vmem [#allocation7], %s256
        %s258 = smul.u32 8, %s23
        %s259 = smul.u32 8, %s23
        %v260 = vld [vmem:[%s227] sm:$0xff]
        %v261 = vld [vmem:[%s227 + $0x8] sm:$0xff]
        %v262 = vld [vmem:[%s227 + $0x10] sm:$0xff]
        %v263 = vld [vmem:[%s227 + $0x18] sm:$0xff]
        %v264 = vld [vmem:[%s227 + $0x20] sm:$0xff]
        %v265 = vld [vmem:[%s227 + $0x28] sm:$0xff]
        %v266 = vld [vmem:[%s227 + $0x30] sm:$0xff]
        %v267 = vld [vmem:[%s227 + $0x38] sm:$0xff]
        %268 = vadd.xlane.f32.xlu0 %v260
        %v269 = vpop.xlane.xlu0 %268
        %270 = vadd.xlane.f32.xlu0 %v261
        %v271 = vpop.xlane.xlu0 %270
        %272 = vadd.xlane.f32.xlu0 %v262
        %v273 = vpop.xlane.xlu0 %272
        %274 = vadd.xlane.f32.xlu0 %v263
        %v275 = vpop.xlane.xlu0 %274
        %276 = vadd.xlane.f32.xlu0 %v264
        %v277 = vpop.xlane.xlu0 %276
        %278 = vadd.xlane.f32.xlu0 %v265
        %v279 = vpop.xlane.xlu0 %278
        %280 = vadd.xlane.f32.xlu0 %v266
        %v281 = vpop.xlane.xlu0 %280
        %282 = vadd.xlane.f32.xlu0 %v267
        %v283 = vpop.xlane.xlu0 %282
        %v284 = vrcp.pop 128.0
        %v285 = vmul.f32 %v269, %v284
        %v286 = vmul.f32 %v271, %v284
        %v287 = vmul.f32 %v273, %v284
        %v288 = vmul.f32 %v275, %v284
        %v289 = vmul.f32 %v277, %v284
        %v290 = vmul.f32 %v279, %v284
        %v291 = vmul.f32 %v281, %v284
        %v292 = vmul.f32 %v283, %v284
        %v293 = vsub.f32 %v260, %v285
        %v294 = vsub.f32 %v261, %v286
        %v295 = vsub.f32 %v262, %v287
        %v296 = vsub.f32 %v263, %v288
        %v297 = vsub.f32 %v264, %v289
        %v298 = vsub.f32 %v265, %v290
        %v299 = vsub.f32 %v266, %v291
        %v300 = vsub.f32 %v267, %v292
        %v301 = vmul.f32 %v293, %v293
        %v302 = vmul.f32 %v294, %v294
        %v303 = vmul.f32 %v295, %v295
        %v304 = vmul.f32 %v296, %v296
        %v305 = vmul.f32 %v297, %v297
        %v306 = vmul.f32 %v298, %v298
        %v307 = vmul.f32 %v299, %v299
        %v308 = vmul.f32 %v300, %v300
        %309 = vadd.xlane.f32.xlu0 %v301
        %v310 = vpop.xlane.xlu0 %309
        %311 = vadd.xlane.f32.xlu0 %v302
        %v312 = vpop.xlane.xlu0 %311
        %313 = vadd.xlane.f32.xlu0 %v303
        %v314 = vpop.xlane.xlu0 %313
        %315 = vadd.xlane.f32.xlu0 %v304
        %v316 = vpop.xlane.xlu0 %315
        %317 = vadd.xlane.f32.xlu0 %v305
        %v318 = vpop.xlane.xlu0 %317
        %319 = vadd.xlane.f32.xlu0 %v306
        %v320 = vpop.xlane.xlu0 %319
        %321 = vadd.xlane.f32.xlu0 %v307
        %v322 = vpop.xlane.xlu0 %321
        %323 = vadd.xlane.f32.xlu0 %v308
        %v324 = vpop.xlane.xlu0 %323
        %v325 = vmul.f32 %v310, %v284
        %v326 = vmul.f32 %v312, %v284
        %v327 = vmul.f32 %v314, %v284
        %v328 = vmul.f32 %v316, %v284
        %v329 = vmul.f32 %v318, %v284
        %v330 = vmul.f32 %v320, %v284
        %v331 = vmul.f32 %v322, %v284
        %v332 = vmul.f32 %v324, %v284
        %v333 = vadd.f32 %v325, 1e-05
        %v334 = vadd.f32 %v326, 1e-05
        %v335 = vadd.f32 %v327, 1e-05
        %v336 = vadd.f32 %v328, 1e-05
        %v337 = vadd.f32 %v329, 1e-05
        %v338 = vadd.f32 %v330, 1e-05
        %v339 = vadd.f32 %v331, 1e-05
        %v340 = vadd.f32 %v332, 1e-05
        %v341 = vrsqrt.pop %v333
        %v342 = vrsqrt.pop %v334
        %v343 = vrsqrt.pop %v335
        %v344 = vrsqrt.pop %v336
        %v345 = vrsqrt.pop %v337
        %v346 = vrsqrt.pop %v338
        %v347 = vrsqrt.pop %v339
        %v348 = vrsqrt.pop %v340
        %v349 = vmul.f32 %v293, %v341
        %v350 = vmul.f32 %v294, %v342
        %v351 = vmul.f32 %v295, %v343
        %v352 = vmul.f32 %v296, %v344
        %v353 = vmul.f32 %v297, %v345
        %v354 = vmul.f32 %v298, %v346
        %v355 = vmul.f32 %v299, %v347
        %v356 = vmul.f32 %v300, %v348
        %v357 = vld [vmem:[%s1] sm:$0x1]
        %v359 = vlaneseq
        %v360 = vshrl.u32 %v359, 7
        %v361 = vsub.s32 0, %v360
        %v362 = vrot.slane %v357, %v361
        %v364 = vmul.f32 %v349, %v362
        %v365 = vmul.f32 %v350, %v362
        %v366 = vmul.f32 %v351, %v362
        %v367 = vmul.f32 %v352, %v362
        %v368 = vmul.f32 %v353, %v362
        %v369 = vmul.f32 %v354, %v362
        %v370 = vmul.f32 %v355, %v362
        %v371 = vmul.f32 %v356, %v362
        %v372 = vld [vmem:[%s2] sm:$0x1]
        %v374 = vlaneseq
        %v375 = vshrl.u32 %v374, 7
        %v376 = vsub.s32 0, %v375
        %v377 = vrot.slane %v372, %v376
        %v379 = vadd.f32 %v364, %v377
        %v380 = vadd.f32 %v365, %v377
        %v381 = vadd.f32 %v366, %v377
        %v382 = vadd.f32 %v367, %v377
        %v383 = vadd.f32 %v368, %v377
        %v384 = vadd.f32 %v369, %v377
        %v385 = vadd.f32 %v370, %v377
        %v386 = vadd.f32 %v371, %v377
        %v387 = vld [vmem:[#allocation5] sm:$0xff]
        %v388 = vld [vmem:[#allocation5 + $0x8] sm:$0xff]
        %v389 = vld [vmem:[#allocation5 + $0x10] sm:$0xff]
        %v390 = vld [vmem:[#allocation5 + $0x18] sm:$0xff]
        %v391 = vld [vmem:[#allocation5 + $0x20] sm:$0xff]
        %v392 = vld [vmem:[#allocation5 + $0x28] sm:$0xff]
        %v393 = vld [vmem:[#allocation5 + $0x30] sm:$0xff]
        %v394 = vld [vmem:[#allocation5 + $0x38] sm:$0xff]
        %v395 = vld [vmem:[#allocation5 + $0x40] sm:$0xff]
        %v396 = vld [vmem:[#allocation5 + $0x48] sm:$0xff]
        %v397 = vld [vmem:[#allocation5 + $0x50] sm:$0xff]
        %v398 = vld [vmem:[#allocation5 + $0x58] sm:$0xff]
        %v399 = vld [vmem:[#allocation5 + $0x60] sm:$0xff]
        %v400 = vld [vmem:[#allocation5 + $0x68] sm:$0xff]
        %v401 = vld [vmem:[#allocation5 + $0x70] sm:$0xff]
        %v402 = vld [vmem:[#allocation5 + $0x78] sm:$0xff]
        %v403 = vld [vmem:[%s4] sm:$0x1]
        %v405 = vlaneseq
        %v406 = vshrl.u32 %v405, 7
        %v407 = vsub.s32 0, %v406
        %v408 = vrot.slane %v403, %v407
        %410 = vmatprep.subr.mxu0 0.0
        %411 = vmatpush1.msra.mxu0 %v387
        %412 = vmatprep.subr.mxu0 0.0
        %413 = vmatpush1.msra.mxu0 %v388
        %414 = vmatprep.subr.mxu0 0.0
        %415 = vmatpush1.msra.mxu0 %v389
        %416 = vmatprep.subr.mxu0 0.0
        %417 = vmatpush1.msra.mxu0 %v390
        %418 = vmatprep.subr.mxu0 0.0
        %419 = vmatpush1.msra.mxu0 %v391
        %420 = vmatprep.subr.mxu0 0.0
        %421 = vmatpush1.msra.mxu0 %v392
        %422 = vmatprep.subr.mxu0 0.0
        %423 = vmatpush1.msra.mxu0 %v393
        %424 = vmatprep.subr.mxu0 0.0
        %425 = vmatpush1.msra.mxu0 %v394
        %426 = vmatprep.subr.mxu0 0.0
        %427 = vmatpush1.msra.mxu0 %v395
        %428 = vmatprep.subr.mxu0 0.0
        %429 = vmatpush1.msra.mxu0 %v396
        %430 = vmatprep.subr.mxu0 0.0
        %431 = vmatpush1.msra.mxu0 %v397
        %432 = vmatprep.subr.mxu0 0.0
        %433 = vmatpush1.msra.mxu0 %v398
        %434 = vmatprep.subr.mxu0 0.0
        %435 = vmatpush1.msra.mxu0 %v399
        %436 = vmatprep.subr.mxu0 0.0
        %437 = vmatpush1.msra.mxu0 %v400
        %438 = vmatprep.subr.mxu0 0.0
        %439 = vmatpush1.msra.mxu0 %v401
        %440 = vmatprep.subr.mxu0 0.0
        %441 = vmatpush1.msra.mxu0 %v402
        %442 = vmatprep.subr.mxu0 0.0
        %443 = vmatpush1.msra.mxu0 0.0
        %444 = vmatprep.subr.mxu0 0.0
        %445 = vmatpush1.msra.mxu0 0.0
        %446 = vmatprep.subr.mxu0 0.0
        %447 = vmatpush1.msra.mxu0 0.0
        %448 = vmatprep.subr.mxu0 0.0
        %449 = vmatpush1.msra.mxu0 0.0
        %450 = vmatprep.subr.mxu0 0.0
        %451 = vmatpush1.msra.mxu0 0.0
        %452 = vmatprep.subr.mxu0 0.0
        %453 = vmatpush1.msra.mxu0 0.0
        %454 = vmatprep.subr.mxu0 0.0
        %455 = vmatpush1.msra.mxu0 0.0
        %456 = vmatprep.subr.mxu0 0.0
        %457 = vmatpush1.msra.mxu0 0.0
        %458 = vmatprep.subr.mxu0 0.0
        %459 = vmatpush1.msra.mxu0 0.0
        %460 = vmatprep.subr.mxu0 0.0
        %461 = vmatpush1.msra.mxu0 0.0
        %462 = vmatprep.subr.mxu0 0.0
        %463 = vmatpush1.msra.mxu0 0.0
        %464 = vmatprep.subr.mxu0 0.0
        %465 = vmatpush1.msra.mxu0 0.0
        %466 = vmatprep.subr.mxu0 0.0
        %467 = vmatpush1.msra.mxu0 0.0
        %468 = vmatprep.subr.mxu0 0.0
        %469 = vmatpush1.msra.mxu0 0.0
        %470 = vmatprep.subr.mxu0 0.0
        %471 = vmatpush1.msra.mxu0 0.0
        %472 = vmatprep.subr.mxu0 0.0
        %473 = vmatpush1.msra.mxu0 0.0
        %474 = vmatprep.mubr.f32.mxu0 0.0
        %475 = vmatmul.mubr.f32.gmra.mrb[0].mxu0 %v379
        %v476 = vpop.f32.mrb[0].mxu0
        %v477 = vadd.f32 %v408, %v476
        %v478 = vpop.f32.mrb[0].mxu0
        %479 = vmatprep.mubr.f32.mxu0 0.0
        %480 = vmatmul.mubr.f32.gmra.mrb[0].mxu0 %v380
        %v481 = vpop.f32.mrb[0].mxu0
        %v482 = vadd.f32 %v408, %v481
        %v483 = vpop.f32.mrb[0].mxu0
        %484 = vmatprep.mubr.f32.mxu0 0.0
        %485 = vmatmul.mubr.f32.gmra.mrb[0].mxu0 %v381
        %v486 = vpop.f32.mrb[0].mxu0
        %v487 = vadd.f32 %v408, %v486
        %v488 = vpop.f32.mrb[0].mxu0
        %489 = vmatprep.mubr.f32.mxu0 0.0
        %490 = vmatmul.mubr.f32.gmra.mrb[0].mxu0 %v382
        %v491 = vpop.f32.mrb[0].mxu0
        %v492 = vadd.f32 %v408, %v491
        %v493 = vpop.f32.mrb[0].mxu0
        %494 = vmatprep.mubr.f32.mxu0 0.0
        %495 = vmatmul.mubr.f32.gmra.mrb[0].mxu0 %v383
        %v496 = vpop.f32.mrb[0].mxu0
        %v497 = vadd.f32 %v408, %v496
        %v498 = vpop.f32.mrb[0].mxu0
        %499 = vmatprep.mubr.f32.mxu0 0.0
        %500 = vmatmul.mubr.f32.gmra.mrb[0].mxu0 %v384
        %v501 = vpop.f32.mrb[0].mxu0
        %v502 = vadd.f32 %v408, %v501
        %v503 = vpop.f32.mrb[0].mxu0
        %504 = vmatprep.mubr.f32.mxu0 0.0
        %505 = vmatmul.mubr.f32.gmra.mrb[0].mxu0 %v385
        %v506 = vpop.f32.mrb[0].mxu0
        %v507 = vadd.f32 %v408, %v506
        %v508 = vpop.f32.mrb[0].mxu0
        %509 = vmatprep.mubr.f32.mxu0 0.0
        %510 = vmatmul.mubr.f32.gmra.mrb[0].mxu0 %v386
        %v511 = vpop.f32.mrb[0].mxu0
        %v512 = vadd.f32 %v408, %v511
        %v513 = vpop.f32.mrb[0].mxu0
        %514 = vdwg.mxu0
        %515 = vst [vmem:[%s257] sm:$0xff] %v477
        %516 = vst [vmem:[%s257 + $0x8] sm:$0xff] %v482
        %517 = vst [vmem:[%s257 + $0x10] sm:$0xff] %v487
        %518 = vst [vmem:[%s257 + $0x18] sm:$0xff] %v492
        %519 = vst [vmem:[%s257 + $0x20] sm:$0xff] %v497
        %520 = vst [vmem:[%s257 + $0x28] sm:$0xff] %v502
        %521 = vst [vmem:[%s257 + $0x30] sm:$0xff] %v507
        %522 = vst [vmem:[%s257 + $0x38] sm:$0xff] %v512
        %s523 = sand.u32 %s141, 1
        %s524 = scalar_lea.sflag [#allocation4], %s523
        %s525 = sand.u32 %s141, 1
        %s526 = smul.addr %s525, 64
        %s527 = scalar_lea.vmem [#allocation7], %s526
        // Predicated region
        $region49: #{tpu_custom_call.1} parent=39 // pred_check
          %p528 = pneg %p151
        $region50: #{tpu_custom_call.1} parent=39 // pred_check_branch
          %530 = sbr.rel (%p528) target = $region52
        $region51: #{tpu_custom_call.1} parent=39 // pred_region
          %s531 = smul.u32 8, %s23
          %s533 = ssub.s32 1024, 1024
          %534 = vsyncadd %s524, %s533
          %s535 = smul.addr %s531, 128
          %s536 = scalar_lea.hbm %s5, %s535
          %s537 = sshll.u32 %s527, 4
          %s538 = int_to_ptr.vmem [resolvable:$true] %s537
          %543 = dma.vmem_to_hbm [thread:$0]  %s538, 1024, %s536, %s524, 128, 128, 8
        $region52: #{tpu_custom_call.1} parent=39 // pred_fallthru
          _
      $region40: #{tpu_custom_call.1} parent=5 // pred_fallthru
        _
      %p544 = scmp.le.s32.totalorder 2, %s18
      // Predicated region
      $region53: #{tpu_custom_call.1} parent=5 // pred_check
        %p545 = pneg %p544
      $region54: #{tpu_custom_call.1} parent=5 // pred_check_branch
        %547 = sbr.rel (%p545) target = $region56
      $region55: #{tpu_custom_call.1} parent=5 // pred_region
        %s548 = ssub.s32 %s18, 2
        // Predicated region
        $region57: #{tpu_custom_call.1} parent=55 // pred_check
          %p549 = pneg %p157
        $region58: #{tpu_custom_call.1} parent=55 // pred_check_branch
          %551 = sbr.rel (%p549) target = $region60
        $region59: #{tpu_custom_call.1} parent=55 // pred_region
          %s552 = sand.u32 %s142, 1
          %s553 = scalar_lea.sflag [#allocation4], %s552
          %s554 = sand.u32 %s142, 1
          %s555 = smul.addr %s554, 64
          %s556 = scalar_lea.vmem [#allocation7], %s555
          %557 = dma.done %s553, 1024
        $region60: #{tpu_custom_call.1} parent=55 // pred_fallthru
          _
      $region56: #{tpu_custom_call.1} parent=5 // pred_fallthru
        _
    $region6: #{tpu_custom_call.1} parent=1 // loop_footer
      %s22 = sadd.s32 1, %s18
    $region7: #{tpu_custom_call.1} parent=1 // loop_footer_branch
      %17 = sbr.rel target = $region3
    $region8: #{tpu_custom_call.1} parent=1 // loop_exit
      _
    %558 = vsyncpa [#allocation3], 1
    %s559 = scalar_lea.sflag [#allocation3], 1
    %560 = vsyncpa %s559, 1
    %561 = vsyncpa [#allocation6], 1
    %562 = vsyncpa [#allocation4], 1
    %s563 = scalar_lea.sflag [#allocation4], 1
    %564 = vsyncpa %s563, 1

</llo_original>
